<compile_context>
chip_gen: v7x
topology: tpu7x:2x2x1
jax: 0.10.0
libtpu: 0.0.40
codegen_flags: <defaults>
</compile_context>

<pallas_src>
import jax
import jax.numpy as jnp
from jax.experimental import pallas as pl
from jax.experimental.pallas import tpu as pltpu


_SMALL_BYTES = 2 * 1024 * 1024         # <= 2 MiB: single whole-array VMEM block
_TARGET_BLOCK_BYTES = 4 * 1024 * 1024  # ~1024 x 1024 f32 tile on the gridded path
_MAX_COLS = 4096                        # cap when merging trailing dims into lanes


def _relu_kernel(x_ref, o_ref):
    # Pure VPU elementwise max with a dtype-typed zero (no promotion for ints).
    x = x_ref[...]
    o_ref[...] = jnp.maximum(x, jnp.zeros((), x.dtype))


def _as_2d(x: jax.Array) -> jax.Array:
    """Zero-copy collapse to a 2-D (rows, cols) view; no padding ever."""
    shape = x.shape
    if x.ndim == 0:
        return x.reshape(1, 1)
    cols = shape[-1]
    i = len(shape) - 1
    # Greedily merge trailing dims into the lane dim while it stays modest.
    while i > 1 and cols * shape[i - 1] <= _MAX_COLS:
        i -= 1
        cols *= shape[i]
    rows = 1
    for d in shape[:i]:
        rows *= d
    return x.reshape(rows, cols)


def _relu_impl(x: jax.Array) -> jax.Array:
    orig_shape = x.shape
    x2d = _as_2d(x)
    rows, cols = x2d.shape
    nbytes = x2d.size * x2d.dtype.itemsize

    if nbytes <= _SMALL_BYTES:
        # ---- small path: one whole-array VMEM block, no grid, no pad ----
        # (For the shipped (1,440,7,7) shape this is a (440, 49) block; the
        # masked partial store on the 49-wide lanes is negligible at 86 KB.)
        out2d = pl.pallas_call(
            _relu_kernel,
            out_shape=jax.ShapeDtypeStruct(x2d.shape, x2d.dtype),
            in_specs=[pl.BlockSpec(memory_space=pltpu.MemorySpace.VMEM)],
            out_specs=pl.BlockSpec(memory_space=pltpu.MemorySpace.VMEM),
            input_output_aliases={0: 0},
        )(x2d)
    else:
        # ---- large path: parallel row grid, lane dim == full cols ----
        # Block last dim equals the full array dim -> (8,128) rule satisfied
        # without padding; ragged row tail handled by the cdiv grid.
        row_bytes = cols * x2d.dtype.itemsize
        block_rows = max(8, (_TARGET_BLOCK_BYTES // max(row_bytes, 1)) // 8 * 8)
        block_rows = min(block_rows, 1024)
        if block_rows >= rows:
            block_rows = rows  # single block covering everything
        grid = (pl.cdiv(rows, block_rows),)
        out2d = pl.pallas_call(
            _relu_kernel,
            out_shape=jax.ShapeDtypeStruct(x2d.shape, x2d.dtype),
            grid_spec=pl.GridSpec(
                grid=grid,
                in_specs=[pl.BlockSpec((block_rows, cols), lambda i: (i, 0))],
                out_specs=pl.BlockSpec((block_rows, cols), lambda i: (i, 0)),
            ),
            input_output_aliases={0: 0},
            compiler_params=pltpu.CompilerParams(
                dimension_semantics=("parallel",),   # v7x: shard grid over 2 TCs
                vmem_limit_bytes=32 * 1024 * 1024,   # v5e default is only 16 MiB
            ),
        )(x2d)

    return out2d.reshape(orig_shape)


# Donate the caller's buffer so the in-place alias inside pallas_call lands on
# the real input (true ReLU(inplace=True) semantics, no defensive copy).
relu_pallas = jax.jit(_relu_impl, donate_argnums=0)


if __name__ == "__main__":
    # Same shape the PyTorch module is exercised with: [1, 440, 7, 7].
    key = jax.random.PRNGKey(0)
    x266 = jax.random.normal(key, (1, 440, 7, 7), dtype=jnp.float32)

    # Compute and materialize the reference BEFORE the donating kernel call.
    ref = jnp.maximum(x266, 0.0)
    jax.block_until_ready(ref)

    x267 = relu_pallas(x266)
    jax.block_until_ready(x267)

    assert x267.shape == (1, 440, 7, 7)
    assert x267.dtype == jnp.float32
    assert jnp.array_equal(x267, ref), "ReLU mismatch"

    print("KERNEL_OK")
</pallas_src>

<mosaic_0001>
module attributes {stable_mosaic.version = 11 : i64} {
  func.func @_relu_kernel(%arg0: memref<440x49xf32, #tpu.memory_space<vmem>>, %arg1: memref<440x49xf32, #tpu.memory_space<vmem>>) attributes {dimension_semantics = [], scalar_prefetch = 0 : i64, scratch_operands = 0 : i64, tpu.core_type = #tpu.core_type<tc>} {
    %c0 = arith.constant 0 : index
    %c0_0 = arith.constant 0 : index
    %0 = vector.load %arg0[%c0, %c0_0] : memref<440x49xf32, #tpu.memory_space<vmem>>, vector<440x49xf32>
    %cst = arith.constant 0.000000e+00 : f32
    %1 = vector.broadcast %cst : f32 to vector<440x49xf32>
    %2 = arith.maximumf %0, %1 : vector<440x49xf32>
    %c0_1 = arith.constant 0 : index
    %c0_2 = arith.constant 0 : index
    %3 = vector.load %arg1[%c0_1, %c0_2] : memref<440x49xf32, #tpu.memory_space<vmem>>, vector<440x49xf32>
    tpu.vector_store %arg1[%c0_1, %c0_2], %2 {strides = array<i32>} : memref<440x49xf32, #tpu.memory_space<vmem>>, vector<440x49xf32>,
    return
  }
}

</mosaic_0001>

<llo_original>
// kernel: _relu_impl.1
$region0: #{_relu_impl.1}
  #allocation0 [shape = 'u32[]', space=smem, size = 0x4, offset = 0x4, fixed_abs, tag = 'smem constant byte address 0x4 - core index']
  #allocation1 [shape = 'u32[144,128]{1,0:T(1,128)}', space=vmem, size = 0x12000, scoped, tag = 'internal scratch']
  %s0 = inlined_call_operand.vmem [shape: f32[440,49], index: 0, kind: input, shape index: {}, may-alias: {0,1}]
  %s1 = inlined_call_operand.vmem [shape: f32[440,49], index: 1, kind: output, shape index: {}, may-alias: {0,1}]
  %s2 = sld [smem:[#allocation0]]
  $region14: #{_relu_impl.1} parent=0
    _
  %s4 = ssub.s32 1, %s2
  %s5 = scalar_select 0, %s4, %s2
  // Predicated region
  $region2: #{_relu_impl.1} parent=0 // pred_check
    _
  $region3: #{_relu_impl.1} parent=0 // pred_check_branch
    %7 = sbr.rel (0) target = $region5
  $region4: #{_relu_impl.1} parent=0 // pred_region
    _
  $region5: #{_relu_impl.1} parent=0 // pred_fallthru
    _
  %v8 = vld [vmem:[%s0] sm:$0xff]
  %v9 = vld [vmem:[%s0 + $0x8] sm:$0xff]
  %v10 = vld [vmem:[%s0 + $0x10] sm:$0xff]
  %v11 = vld [vmem:[%s0 + $0x18] sm:$0xff]
  %v12 = vld [vmem:[%s0 + $0x20] sm:$0xff]
  %v13 = vld [vmem:[%s0 + $0x28] sm:$0xff]
  %v14 = vld [vmem:[%s0 + $0x30] sm:$0xff]
  %v15 = vld [vmem:[%s0 + $0x38] sm:$0xff]
  %v16 = vld [vmem:[%s0 + $0x40] sm:$0xff]
  %v17 = vld [vmem:[%s0 + $0x48] sm:$0xff]
  %v18 = vld [vmem:[%s0 + $0x50] sm:$0xff]
  %v19 = vld [vmem:[%s0 + $0x58] sm:$0xff]
  %v20 = vld [vmem:[%s0 + $0x60] sm:$0xff]
  %v21 = vld [vmem:[%s0 + $0x68] sm:$0xff]
  %v22 = vld [vmem:[%s0 + $0x70] sm:$0xff]
  %v23 = vld [vmem:[%s0 + $0x78] sm:$0xff]
  %v24 = vld [vmem:[%s0 + $0x80] sm:$0xff]
  %v25 = vld [vmem:[%s0 + $0x88] sm:$0xff]
  %v26 = vld [vmem:[%s0 + $0x90] sm:$0xff]
  %v27 = vld [vmem:[%s0 + $0x98] sm:$0xff]
  %v28 = vld [vmem:[%s0 + $0xa0] sm:$0xff]
  %v29 = vld [vmem:[%s0 + $0xa8] sm:$0xff]
  %v30 = vld [vmem:[%s0 + $0xb0] sm:$0xff]
  %v31 = vld [vmem:[%s0 + $0xb8] sm:$0xff]
  %v32 = vld [vmem:[%s0 + $0xc0] sm:$0xff]
  %v33 = vld [vmem:[%s0 + $0xc8] sm:$0xff]
  %v34 = vld [vmem:[%s0 + $0xd0] sm:$0xff]
  %v35 = vld [vmem:[%s0 + $0xd8] sm:$0xff]
  %v36 = vld [vmem:[%s0 + $0xe0] sm:$0xff]
  %v37 = vld [vmem:[%s0 + $0xe8] sm:$0xff]
  %v38 = vld [vmem:[%s0 + $0xf0] sm:$0xff]
  %v39 = vld [vmem:[%s0 + $0xf8] sm:$0xff]
  %v40 = vld [vmem:[%s0 + $0x100] sm:$0xff]
  %v41 = vld [vmem:[%s0 + $0x108] sm:$0xff]
  %v42 = vld [vmem:[%s0 + $0x110] sm:$0xff]
  %v43 = vld [vmem:[%s0 + $0x118] sm:$0xff]
  %v44 = vld [vmem:[%s0 + $0x120] sm:$0xff]
  %v45 = vld [vmem:[%s0 + $0x128] sm:$0xff]
  %v46 = vld [vmem:[%s0 + $0x130] sm:$0xff]
  %v47 = vld [vmem:[%s0 + $0x138] sm:$0xff]
  %v48 = vld [vmem:[%s0 + $0x140] sm:$0xff]
  %v49 = vld [vmem:[%s0 + $0x148] sm:$0xff]
  %v50 = vld [vmem:[%s0 + $0x150] sm:$0xff]
  %v51 = vld [vmem:[%s0 + $0x158] sm:$0xff]
  %v52 = vld [vmem:[%s0 + $0x160] sm:$0xff]
  %v53 = vld [vmem:[%s0 + $0x168] sm:$0xff]
  %v54 = vld [vmem:[%s0 + $0x170] sm:$0xff]
  %v55 = vld [vmem:[%s0 + $0x178] sm:$0xff]
  %v56 = vld [vmem:[%s0 + $0x180] sm:$0xff]
  %v57 = vld [vmem:[%s0 + $0x188] sm:$0xff]
  %v58 = vld [vmem:[%s0 + $0x190] sm:$0xff]
  %v59 = vld [vmem:[%s0 + $0x198] sm:$0xff]
  %v60 = vld [vmem:[%s0 + $0x1a0] sm:$0xff]
  %v61 = vld [vmem:[%s0 + $0x1a8] sm:$0xff]
  %v62 = vld [vmem:[%s0 + $0x1b0] sm:$0xff]
  %v63 = vmax.f32 %v8, 0.0
  %v64 = vmax.f32 %v9, 0.0
  %v65 = vmax.f32 %v10, 0.0
  %v66 = vmax.f32 %v11, 0.0
  %v67 = vmax.f32 %v12, 0.0
  %v68 = vmax.f32 %v13, 0.0
  %v69 = vmax.f32 %v14, 0.0
  %v70 = vmax.f32 %v15, 0.0
  %v71 = vmax.f32 %v16, 0.0
  %v72 = vmax.f32 %v17, 0.0
  %v73 = vmax.f32 %v18, 0.0
  %v74 = vmax.f32 %v19, 0.0
  %v75 = vmax.f32 %v20, 0.0
  %v76 = vmax.f32 %v21, 0.0
  %v77 = vmax.f32 %v22, 0.0
  %v78 = vmax.f32 %v23, 0.0
  %v79 = vmax.f32 %v24, 0.0
  %v80 = vmax.f32 %v25, 0.0
  %v81 = vmax.f32 %v26, 0.0
  %v82 = vmax.f32 %v27, 0.0
  %v83 = vmax.f32 %v28, 0.0
  %v84 = vmax.f32 %v29, 0.0
  %v85 = vmax.f32 %v30, 0.0
  %v86 = vmax.f32 %v31, 0.0
  %v87 = vmax.f32 %v32, 0.0
  %v88 = vmax.f32 %v33, 0.0
  %v89 = vmax.f32 %v34, 0.0
  %v90 = vmax.f32 %v35, 0.0
  %v91 = vmax.f32 %v36, 0.0
  %v92 = vmax.f32 %v37, 0.0
  %v93 = vmax.f32 %v38, 0.0
  %v94 = vmax.f32 %v39, 0.0
  %v95 = vmax.f32 %v40, 0.0
  %v96 = vmax.f32 %v41, 0.0
  %v97 = vmax.f32 %v42, 0.0
  %v98 = vmax.f32 %v43, 0.0
  %v99 = vmax.f32 %v44, 0.0
  %v100 = vmax.f32 %v45, 0.0
  %v101 = vmax.f32 %v46, 0.0
  %v102 = vmax.f32 %v47, 0.0
  %v103 = vmax.f32 %v48, 0.0
  %v104 = vmax.f32 %v49, 0.0
  %v105 = vmax.f32 %v50, 0.0
  %v106 = vmax.f32 %v51, 0.0
  %v107 = vmax.f32 %v52, 0.0
  %v108 = vmax.f32 %v53, 0.0
  %v109 = vmax.f32 %v54, 0.0
  %v110 = vmax.f32 %v55, 0.0
  %v111 = vmax.f32 %v56, 0.0
  %v112 = vmax.f32 %v57, 0.0
  %v113 = vmax.f32 %v58, 0.0
  %v114 = vmax.f32 %v59, 0.0
  %v115 = vmax.f32 %v60, 0.0
  %v116 = vmax.f32 %v61, 0.0
  %v117 = vmax.f32 %v62, 0.0
  %vm118 = vcmask 400384
  %119 = vst.msk [vmem:[%s1] sm:$0xff] %vm118, %v63
  %120 = vst.msk [vmem:[%s1 + $0x8] sm:$0xff] %vm118, %v64
  %121 = vst.msk [vmem:[%s1 + $0x10] sm:$0xff] %vm118, %v65
  %122 = vst.msk [vmem:[%s1 + $0x18] sm:$0xff] %vm118, %v66
  %123 = vst.msk [vmem:[%s1 + $0x20] sm:$0xff] %vm118, %v67
  %124 = vst.msk [vmem:[%s1 + $0x28] sm:$0xff] %vm118, %v68
  %125 = vst.msk [vmem:[%s1 + $0x30] sm:$0xff] %vm118, %v69
  %126 = vst.msk [vmem:[%s1 + $0x38] sm:$0xff] %vm118, %v70
  %127 = vst.msk [vmem:[%s1 + $0x40] sm:$0xff] %vm118, %v71
  %128 = vst.msk [vmem:[%s1 + $0x48] sm:$0xff] %vm118, %v72
  %129 = vst.msk [vmem:[%s1 + $0x50] sm:$0xff] %vm118, %v73
  %130 = vst.msk [vmem:[%s1 + $0x58] sm:$0xff] %vm118, %v74
  %131 = vst.msk [vmem:[%s1 + $0x60] sm:$0xff] %vm118, %v75
  %132 = vst.msk [vmem:[%s1 + $0x68] sm:$0xff] %vm118, %v76
  %133 = vst.msk [vmem:[%s1 + $0x70] sm:$0xff] %vm118, %v77
  %134 = vst.msk [vmem:[%s1 + $0x78] sm:$0xff] %vm118, %v78
  %135 = vst.msk [vmem:[%s1 + $0x80] sm:$0xff] %vm118, %v79
  %136 = vst.msk [vmem:[%s1 + $0x88] sm:$0xff] %vm118, %v80
  %137 = vst.msk [vmem:[%s1 + $0x90] sm:$0xff] %vm118, %v81
  %138 = vst.msk [vmem:[%s1 + $0x98] sm:$0xff] %vm118, %v82
  %139 = vst.msk [vmem:[%s1 + $0xa0] sm:$0xff] %vm118, %v83
  %140 = vst.msk [vmem:[%s1 + $0xa8] sm:$0xff] %vm118, %v84
  %141 = vst.msk [vmem:[%s1 + $0xb0] sm:$0xff] %vm118, %v85
  %142 = vst.msk [vmem:[%s1 + $0xb8] sm:$0xff] %vm118, %v86
  %143 = vst.msk [vmem:[%s1 + $0xc0] sm:$0xff] %vm118, %v87
  %144 = vst.msk [vmem:[%s1 + $0xc8] sm:$0xff] %vm118, %v88
  %145 = vst.msk [vmem:[%s1 + $0xd0] sm:$0xff] %vm118, %v89
  %146 = vst.msk [vmem:[%s1 + $0xd8] sm:$0xff] %vm118, %v90
  %147 = vst.msk [vmem:[%s1 + $0xe0] sm:$0xff] %vm118, %v91
  %148 = vst.msk [vmem:[%s1 + $0xe8] sm:$0xff] %vm118, %v92
  %149 = vst.msk [vmem:[%s1 + $0xf0] sm:$0xff] %vm118, %v93
  %150 = vst.msk [vmem:[%s1 + $0xf8] sm:$0xff] %vm118, %v94
  %151 = vst.msk [vmem:[%s1 + $0x100] sm:$0xff] %vm118, %v95
  %152 = vst.msk [vmem:[%s1 + $0x108] sm:$0xff] %vm118, %v96
  %153 = vst.msk [vmem:[%s1 + $0x110] sm:$0xff] %vm118, %v97
  %154 = vst.msk [vmem:[%s1 + $0x118] sm:$0xff] %vm118, %v98
  %155 = vst.msk [vmem:[%s1 + $0x120] sm:$0xff] %vm118, %v99
  %156 = vst.msk [vmem:[%s1 + $0x128] sm:$0xff] %vm118, %v100
  %157 = vst.msk [vmem:[%s1 + $0x130] sm:$0xff] %vm118, %v101
  %158 = vst.msk [vmem:[%s1 + $0x138] sm:$0xff] %vm118, %v102
  %159 = vst.msk [vmem:[%s1 + $0x140] sm:$0xff] %vm118, %v103
  %160 = vst.msk [vmem:[%s1 + $0x148] sm:$0xff] %vm118, %v104
  %161 = vst.msk [vmem:[%s1 + $0x150] sm:$0xff] %vm118, %v105
  %162 = vst.msk [vmem:[%s1 + $0x158] sm:$0xff] %vm118, %v106
  %163 = vst.msk [vmem:[%s1 + $0x160] sm:$0xff] %vm118, %v107
  %164 = vst.msk [vmem:[%s1 + $0x168] sm:$0xff] %vm118, %v108
  %165 = vst.msk [vmem:[%s1 + $0x170] sm:$0xff] %vm118, %v109
  %166 = vst.msk [vmem:[%s1 + $0x178] sm:$0xff] %vm118, %v110
  %167 = vst.msk [vmem:[%s1 + $0x180] sm:$0xff] %vm118, %v111
  %168 = vst.msk [vmem:[%s1 + $0x188] sm:$0xff] %vm118, %v112
  %169 = vst.msk [vmem:[%s1 + $0x190] sm:$0xff] %vm118, %v113
  %170 = vst.msk [vmem:[%s1 + $0x198] sm:$0xff] %vm118, %v114
  %171 = vst.msk [vmem:[%s1 + $0x1a0] sm:$0xff] %vm118, %v115
  %172 = vst.msk [vmem:[%s1 + $0x1a8] sm:$0xff] %vm118, %v116
  %173 = vst.msk [vmem:[%s1 + $0x1b0] sm:$0xff] %vm118, %v117
  // Predicated region
  $region6: #{_relu_impl.1} parent=0 // pred_check
    _
  $region7: #{_relu_impl.1} parent=0 // pred_check_branch
    %175 = sbr.rel (0) target = $region9
  $region8: #{_relu_impl.1} parent=0 // pred_region
    _
  $region9: #{_relu_impl.1} parent=0 // pred_fallthru
    _
  // Predicated region
  $region10: #{_relu_impl.1} parent=0 // pred_check
    _
  $region11: #{_relu_impl.1} parent=0 // pred_check_branch
    %177 = sbr.rel (0) target = $region13
  $region12: #{_relu_impl.1} parent=0 // pred_region
    _
  $region13: #{_relu_impl.1} parent=0 // pred_fallthru
    _

</llo_original>
